<compile_context>
chip_gen: v7x
topology: tpu7x:2x2x1
jax: 0.10.0
libtpu: 0.0.40
codegen_flags: <defaults>
</compile_context>

<pallas_src>
import jax
import jax.numpy as jnp
from jax.experimental import pallas as pl
from jax.experimental.pallas import tpu as pltpu

_LANE = 128
_SUBLANE = 8


def _round_up(n, m):
    return ((n + m - 1) // m) * m


def _leaky_relu(h, slope=0.01):
    return jnp.where(h > 0, h, slope * h)


def _vae_forward_kernel(
    x_ref, eps_ref,
    we1_ref, be1_ref, we2_ref, be2_ref, we3_ref, be3_ref,
    wh_ref, bh_ref,
    wd1_ref, bd1_ref, wd2_ref, bd2_ref, wd3_ref, bd3_ref,
    recon_ref, heads_ref,
):
    bf16 = jnp.bfloat16
    x = x_ref[...]  # bf16 [TB, Din_pad]

    # ---- encoder: Linear -> LeakyReLU -> (Dropout=id) x2 -> Linear ----
    h = jnp.dot(x, we1_ref[...], preferred_element_type=jnp.float32) + be1_ref[...]
    h = _leaky_relu(h)
    h = jnp.dot(h.astype(bf16), we2_ref[...], preferred_element_type=jnp.float32) + be2_ref[...]
    h = _leaky_relu(h)
    enc = jnp.dot(h.astype(bf16), we3_ref[...], preferred_element_type=jnp.float32) + be3_ref[...]

    # ---- fused mu || logvar heads (one MXU dispatch, lane-dense output) ----
    heads = jnp.dot(enc.astype(bf16), wh_ref[...], preferred_element_type=jnp.float32) + bh_ref[...]
    l_pad = heads.shape[-1] // 2
    mu = heads[:, :l_pad]
    logvar = heads[:, l_pad:]

    # ---- reparameterization in f32: z = mu + eps * exp(0.5 * logvar) ----
    z = mu + eps_ref[...] * jnp.exp(0.5 * logvar)

    # ---- decoder: Linear -> LeakyReLU -> (Dropout=id) x2 -> Linear ----
    d = jnp.dot(z.astype(bf16), wd1_ref[...], preferred_element_type=jnp.float32) + bd1_ref[...]
    d = _leaky_relu(d)
    d = jnp.dot(d.astype(bf16), wd2_ref[...], preferred_element_type=jnp.float32) + bd2_ref[...]
    d = _leaky_relu(d)
    recon = jnp.dot(d.astype(bf16), wd3_ref[...], preferred_element_type=jnp.float32) + bd3_ref[...]

    recon_ref[...] = recon.astype(recon_ref.dtype)
    heads_ref[...] = heads.astype(heads_ref.dtype)


def normative_vae_forward(x, eps, packed, latent_dim, tile_b=256):
    """Full VAE forward pass inside one batch-tiled Pallas kernel.

    x:      [B, input_dim] float32
    eps:    [B, latent_dim] float32  (N(0,1) noise for reparameterization)
    packed: padded / bf16 kernel params from pack_params().
    Returns (recon [B, input_dim], mu [B, latent_dim], logvar [B, latent_dim]).
    """
    B, input_dim = x.shape
    din_pad = packed["w_e1"].shape[0]
    l_pad = packed["w_heads"].shape[1] // 2

    # Batch tile: MXU-sized by default, shrunk for tiny batches (8-row aligned).
    tb = min(tile_b, _round_up(B, _SUBLANE))
    tb = max(_SUBLANE, _round_up(tb, _SUBLANE))
    b_pad = _round_up(B, tb)

    # Zero-padded, lane-dense inputs. x goes in as bf16 (halves input DMA).
    x_p = jnp.zeros((b_pad, din_pad), jnp.bfloat16)
    x_p = x_p.at[:B, :input_dim].set(x.astype(jnp.bfloat16))
    eps_p = jnp.zeros((b_pad, l_pad), jnp.float32)
    eps_p = eps_p.at[:B, :latent_dim].set(eps.astype(jnp.float32))

    ordered = [
        x_p, eps_p,
        packed["w_e1"], packed["b_e1"],
        packed["w_e2"], packed["b_e2"],
        packed["w_e3"], packed["b_e3"],
        packed["w_heads"], packed["b_heads"],
        packed["w_d1"], packed["b_d1"],
        packed["w_d2"], packed["b_d2"],
        packed["w_d3"], packed["b_d3"],
    ]

    def batch_spec(n_cols):
        return pl.BlockSpec((tb, n_cols), lambda i: (i, 0))

    def resident_spec(arr):
        # Full array, same block for every grid step -> stays VMEM-resident.
        return pl.BlockSpec(arr.shape, lambda i: (0, 0))

    in_specs = [batch_spec(din_pad), batch_spec(l_pad)]
    in_specs += [resident_spec(a) for a in ordered[2:]]
    out_specs = (batch_spec(din_pad), batch_spec(2 * l_pad))
    out_shape = (
        jax.ShapeDtypeStruct((b_pad, din_pad), jnp.float32),
        jax.ShapeDtypeStruct((b_pad, 2 * l_pad), jnp.float32),
    )

    recon_p, heads_p = pl.pallas_call(
        _vae_forward_kernel,
        out_shape=out_shape,
        grid=(b_pad // tb,),
        in_specs=in_specs,
        out_specs=out_specs,
        compiler_params=pltpu.CompilerParams(
            dimension_semantics=("parallel",),   # shard batch tiles across TCs (v7x)
            vmem_limit_bytes=48 * 1024 * 1024,   # safe on v5e/v6e/v7x
        ),
    )(*ordered)

    recon = recon_p[:B, :input_dim]
    mu = heads_p[:B, :latent_dim]
    logvar = heads_p[:B, l_pad:l_pad + latent_dim]
    return recon, mu, logvar


# ----------------------------------------------------------------------------
# Parameter construction (weights stored as [in, out], transposed vs PyTorch).
# ----------------------------------------------------------------------------
def _xavier_uniform(key, fan_in, fan_out):
    bound = jnp.sqrt(6.0 / (fan_in + fan_out))
    return jax.random.uniform(
        key, (fan_in, fan_out), jnp.float32, minval=-bound, maxval=bound
    )


def init_params(key, input_dim, hidden_dim_1, hidden_dim_2, latent_dim):
    """Semantic (unpadded, f32) params, matching the PyTorch module init."""
    keys = jax.random.split(key, 8)
    p = {}
    # encoder
    p["w_e1"] = _xavier_uniform(keys[0], input_dim, hidden_dim_1)
    p["b_e1"] = jnp.zeros((hidden_dim_1,), jnp.float32)
    p["w_e2"] = _xavier_uniform(keys[1], hidden_dim_1, hidden_dim_2)
    p["b_e2"] = jnp.zeros((hidden_dim_2,), jnp.float32)
    p["w_e3"] = _xavier_uniform(keys[2], hidden_dim_2, latent_dim)
    p["b_e3"] = jnp.zeros((latent_dim,), jnp.float32)
    # heads
    p["w_mu"] = _xavier_uniform(keys[3], latent_dim, latent_dim)
    p["b_mu"] = jnp.zeros((latent_dim,), jnp.float32)
    p["w_var"] = _xavier_uniform(keys[4], latent_dim, latent_dim)
    p["b_var"] = jnp.zeros((latent_dim,), jnp.float32)
    # decoder
    p["w_d1"] = _xavier_uniform(keys[5], latent_dim, hidden_dim_2)
    p["b_d1"] = jnp.zeros((hidden_dim_2,), jnp.float32)
    p["w_d2"] = _xavier_uniform(keys[6], hidden_dim_2, hidden_dim_1)
    p["b_d2"] = jnp.zeros((hidden_dim_1,), jnp.float32)
    p["w_d3"] = _xavier_uniform(keys[7], hidden_dim_1, input_dim)
    p["b_d3"] = jnp.zeros((input_dim,), jnp.float32)
    return p


def pack_params(p):
    """Pad feature dims to multiples of 128, cast weights to bf16, fuse heads."""
    def pad_w(w):
        i, o = w.shape
        ip, op = _round_up(i, _LANE), _round_up(o, _LANE)
        return jnp.pad(w, ((0, ip - i), (0, op - o))).astype(jnp.bfloat16)

    def pad_b(b):
        o = b.shape[0]
        op = _round_up(o, _LANE)
        return jnp.pad(b, (0, op - o)).reshape(1, op).astype(jnp.float32)

    packed = {}
    for name in ("e1", "e2", "e3", "d1", "d2", "d3"):
        packed["w_" + name] = pad_w(p["w_" + name])
        packed["b_" + name] = pad_b(p["b_" + name])

    # Fused mu||logvar head: [L_pad, 2*L_pad] weight and [1, 2*L_pad] bias.
    l_in, l_out = p["w_mu"].shape
    lp = _round_up(l_out, _LANE)
    w_mu_p = jnp.pad(p["w_mu"], ((0, lp - l_in), (0, lp - l_out)))
    w_lv_p = jnp.pad(p["w_var"], ((0, lp - l_in), (0, lp - l_out)))
    packed["w_heads"] = jnp.concatenate([w_mu_p, w_lv_p], axis=1).astype(jnp.bfloat16)
    b_mu_p = jnp.pad(p["b_mu"], (0, lp - l_out))
    b_lv_p = jnp.pad(p["b_var"], (0, lp - l_out))
    packed["b_heads"] = jnp.concatenate([b_mu_p, b_lv_p]).reshape(1, 2 * lp).astype(jnp.float32)
    return packed


def _reference_forward(x, eps, p):
    """Pure-JAX reference with the same bf16-matmul / f32-elementwise numerics."""
    lrelu = lambda h: jnp.where(h > 0, h, 0.01 * h)
    bf = jnp.bfloat16
    mm = lambda a, w: jnp.dot(a.astype(bf), w.astype(bf),
                              preferred_element_type=jnp.float32)
    h = lrelu(mm(x, p["w_e1"]) + p["b_e1"])
    h = lrelu(mm(h, p["w_e2"]) + p["b_e2"])
    enc = mm(h, p["w_e3"]) + p["b_e3"]
    mu = mm(enc, p["w_mu"]) + p["b_mu"]
    logvar = mm(enc, p["w_var"]) + p["b_var"]
    z = mu + eps * jnp.exp(0.5 * logvar)
    d = lrelu(mm(z, p["w_d1"]) + p["b_d1"])
    d = lrelu(mm(d, p["w_d2"]) + p["b_d2"])
    recon = mm(d, p["w_d3"]) + p["b_d3"]
    return recon, mu, logvar


if __name__ == "__main__":
    # Small shapes consistent with the module (Linear MLP VAE).
    B = 16
    INPUT_DIM = 64
    HIDDEN_1 = 32
    HIDDEN_2 = 32
    LATENT = 16

    key = jax.random.PRNGKey(0)
    k_x, k_eps, k_params = jax.random.split(key, 3)

    x = jax.random.normal(k_x, (B, INPUT_DIM), jnp.float32)
    eps = jax.random.normal(k_eps, (B, LATENT), jnp.float32)
    params = init_params(k_params, INPUT_DIM, HIDDEN_1, HIDDEN_2, LATENT)
    packed = pack_params(params)

    recon, mu, logvar = normative_vae_forward(x, eps, packed, LATENT)
    jax.block_until_ready((recon, mu, logvar))

    assert recon.shape == (B, INPUT_DIM)
    assert mu.shape == (B, LATENT) and logvar.shape == (B, LATENT)

    # Correctness check against a numerics-matched pure-JAX reference.
    r_ref, m_ref, lv_ref = _reference_forward(x, eps, params)
    assert jnp.allclose(recon, r_ref, atol=2e-3, rtol=2e-3)
    assert jnp.allclose(mu, m_ref, atol=2e-3, rtol=2e-3)
    assert jnp.allclose(logvar, lv_ref, atol=2e-3, rtol=2e-3)

    # TODO(synk): nn.Dropout is stochastic in train mode; kernel implements
    # eval/inference semantics (identity), matching reconstruct()/validate().
    print("KERNEL_OK")
</pallas_src>

<mosaic_0001>
module attributes {stable_mosaic.version = 11 : i64} {
  func.func @_vae_forward_kernel(%arg0: i32, %arg1: memref<16x128xbf16, #tpu.memory_space<vmem>>, %arg2: memref<16x128xf32, #tpu.memory_space<vmem>>, %arg3: memref<128x128xbf16, #tpu.memory_space<vmem>>, %arg4: memref<1x128xf32, #tpu.memory_space<vmem>>, %arg5: memref<128x128xbf16, #tpu.memory_space<vmem>>, %arg6: memref<1x128xf32, #tpu.memory_space<vmem>>, %arg7: memref<128x128xbf16, #tpu.memory_space<vmem>>, %arg8: memref<1x128xf32, #tpu.memory_space<vmem>>, %arg9: memref<128x256xbf16, #tpu.memory_space<vmem>>, %arg10: memref<1x256xf32, #tpu.memory_space<vmem>>, %arg11: memref<128x128xbf16, #tpu.memory_space<vmem>>, %arg12: memref<1x128xf32, #tpu.memory_space<vmem>>, %arg13: memref<128x128xbf16, #tpu.memory_space<vmem>>, %arg14: memref<1x128xf32, #tpu.memory_space<vmem>>, %arg15: memref<128x128xbf16, #tpu.memory_space<vmem>>, %arg16: memref<1x128xf32, #tpu.memory_space<vmem>>, %arg17: memref<16x128xf32, #tpu.memory_space<vmem>>, %arg18: memref<16x256xf32, #tpu.memory_space<vmem>>) attributes {dimension_semantics = [#tpu.dimension_semantics<parallel>], iteration_bounds = array<i64: 1>, scalar_prefetch = 0 : i64, scratch_operands = 0 : i64, tpu.core_type = #tpu.core_type<tc>, window_params = [{transform_indices = @transform_0, window_bounds = array<i64: 16, 128>}, {transform_indices = @transform_1, window_bounds = array<i64: 16, 128>}, {pipeline_mode = #tpu.pipeline_mode<synchronous>, transform_indices = @transform_2, window_bounds = array<i64: 128, 128>}, {pipeline_mode = #tpu.pipeline_mode<synchronous>, transform_indices = @transform_3, window_bounds = array<i64: 1, 128>}, {pipeline_mode = #tpu.pipeline_mode<synchronous>, transform_indices = @transform_4, window_bounds = array<i64: 128, 128>}, {pipeline_mode = #tpu.pipeline_mode<synchronous>, transform_indices = @transform_5, window_bounds = array<i64: 1, 128>}, {pipeline_mode = #tpu.pipeline_mode<synchronous>, transform_indices = @transform_6, window_bounds = array<i64: 128, 128>}, {pipeline_mode = #tpu.pipeline_mode<synchronous>, transform_indices = @transform_7, window_bounds = array<i64: 1, 128>}, {pipeline_mode = #tpu.pipeline_mode<synchronous>, transform_indices = @transform_8, window_bounds = array<i64: 128, 256>}, {pipeline_mode = #tpu.pipeline_mode<synchronous>, transform_indices = @transform_9, window_bounds = array<i64: 1, 256>}, {pipeline_mode = #tpu.pipeline_mode<synchronous>, transform_indices = @transform_10, window_bounds = array<i64: 128, 128>}, {pipeline_mode = #tpu.pipeline_mode<synchronous>, transform_indices = @transform_11, window_bounds = array<i64: 1, 128>}, {pipeline_mode = #tpu.pipeline_mode<synchronous>, transform_indices = @transform_12, window_bounds = array<i64: 128, 128>}, {pipeline_mode = #tpu.pipeline_mode<synchronous>, transform_indices = @transform_13, window_bounds = array<i64: 1, 128>}, {pipeline_mode = #tpu.pipeline_mode<synchronous>, transform_indices = @transform_14, window_bounds = array<i64: 128, 128>}, {pipeline_mode = #tpu.pipeline_mode<synchronous>, transform_indices = @transform_15, window_bounds = array<i64: 1, 128>}, {transform_indices = @transform_16, window_bounds = array<i64: 16, 128>}, {transform_indices = @transform_17, window_bounds = array<i64: 16, 256>}]} {
    %c0 = arith.constant 0 : index
    %c0_0 = arith.constant 0 : index
    %0 = vector.load %arg1[%c0, %c0_0] : memref<16x128xbf16, #tpu.memory_space<vmem>>, vector<16x128xbf16>
    %c0_1 = arith.constant 0 : index
    %c0_2 = arith.constant 0 : index
    %1 = vector.load %arg3[%c0_1, %c0_2] : memref<128x128xbf16, #tpu.memory_space<vmem>>, vector<128x128xbf16>
    %cst = arith.constant dense<0.000000e+00> : vector<16x128xf32>
    %2 = tpu.matmul %0, %1, %cst {dimension_numbers = #tpu.dot_dimension_numbers<[1], [0], [0], [1], [0, 0, 1, 1], [], []>} : vector<16x128xbf16>, vector<128x128xbf16>, vector<16x128xf32> -> vector<16x128xf32>
    %c0_3 = arith.constant 0 : index
    %c0_4 = arith.constant 0 : index
    %3 = vector.load %arg4[%c0_3, %c0_4] : memref<1x128xf32, #tpu.memory_space<vmem>>, vector<1x128xf32>
    %4 = vector.broadcast %3 : vector<1x128xf32> to vector<16x128xf32>
    %5 = arith.addf %2, %4 : vector<16x128xf32>
    %cst_5 = arith.constant 0.000000e+00 : f32
    %6 = vector.broadcast %cst_5 : f32 to vector<16x128xf32>
    %7 = arith.cmpf ogt, %5, %6 : vector<16x128xf32>
    %cst_6 = arith.constant 0.00999999977 : f32
    %8 = vector.broadcast %cst_6 : f32 to vector<16x128xf32>
    %9 = arith.mulf %8, %5 : vector<16x128xf32>
    %10 = arith.select %7, %5, %9 : vector<16x128xi1>, vector<16x128xf32>
    %11 = arith.truncf %10 : vector<16x128xf32> to vector<16x128xbf16>
    %c0_7 = arith.constant 0 : index
    %c0_8 = arith.constant 0 : index
    %12 = vector.load %arg5[%c0_7, %c0_8] : memref<128x128xbf16, #tpu.memory_space<vmem>>, vector<128x128xbf16>
    %cst_9 = arith.constant dense<0.000000e+00> : vector<16x128xf32>
    %13 = tpu.matmul %11, %12, %cst_9 {dimension_numbers = #tpu.dot_dimension_numbers<[1], [0], [0], [1], [0, 0, 1, 1], [], []>} : vector<16x128xbf16>, vector<128x128xbf16>, vector<16x128xf32> -> vector<16x128xf32>
    %c0_10 = arith.constant 0 : index
    %c0_11 = arith.constant 0 : index
    %14 = vector.load %arg6[%c0_10, %c0_11] : memref<1x128xf32, #tpu.memory_space<vmem>>, vector<1x128xf32>
    %15 = vector.broadcast %14 : vector<1x128xf32> to vector<16x128xf32>
    %16 = arith.addf %13, %15 : vector<16x128xf32>
    %cst_12 = arith.constant 0.000000e+00 : f32
    %17 = vector.broadcast %cst_12 : f32 to vector<16x128xf32>
    %18 = arith.cmpf ogt, %16, %17 : vector<16x128xf32>
    %cst_13 = arith.constant 0.00999999977 : f32
    %19 = vector.broadcast %cst_13 : f32 to vector<16x128xf32>
    %20 = arith.mulf %19, %16 : vector<16x128xf32>
    %21 = arith.select %18, %16, %20 : vector<16x128xi1>, vector<16x128xf32>
    %22 = arith.truncf %21 : vector<16x128xf32> to vector<16x128xbf16>
    %c0_14 = arith.constant 0 : index
    %c0_15 = arith.constant 0 : index
    %23 = vector.load %arg7[%c0_14, %c0_15] : memref<128x128xbf16, #tpu.memory_space<vmem>>, vector<128x128xbf16>
    %cst_16 = arith.constant dense<0.000000e+00> : vector<16x128xf32>
    %24 = tpu.matmul %22, %23, %cst_16 {dimension_numbers = #tpu.dot_dimension_numbers<[1], [0], [0], [1], [0, 0, 1, 1], [], []>} : vector<16x128xbf16>, vector<128x128xbf16>, vector<16x128xf32> -> vector<16x128xf32>
    %c0_17 = arith.constant 0 : index
    %c0_18 = arith.constant 0 : index
    %25 = vector.load %arg8[%c0_17, %c0_18] : memref<1x128xf32, #tpu.memory_space<vmem>>, vector<1x128xf32>
    %26 = vector.broadcast %25 : vector<1x128xf32> to vector<16x128xf32>
    %27 = arith.addf %24, %26 : vector<16x128xf32>
    %28 = arith.truncf %27 : vector<16x128xf32> to vector<16x128xbf16>
    %c0_19 = arith.constant 0 : index
    %c0_20 = arith.constant 0 : index
    %29 = vector.load %arg9[%c0_19, %c0_20] : memref<128x256xbf16, #tpu.memory_space<vmem>>, vector<128x256xbf16>
    %cst_21 = arith.constant dense<0.000000e+00> : vector<16x256xf32>
    %30 = tpu.matmul %28, %29, %cst_21 {dimension_numbers = #tpu.dot_dimension_numbers<[1], [0], [0], [1], [0, 0, 1, 1], [], []>} : vector<16x128xbf16>, vector<128x256xbf16>, vector<16x256xf32> -> vector<16x256xf32>
    %c0_22 = arith.constant 0 : index
    %c0_23 = arith.constant 0 : index
    %31 = vector.load %arg10[%c0_22, %c0_23] : memref<1x256xf32, #tpu.memory_space<vmem>>, vector<1x256xf32>
    %32 = vector.broadcast %31 : vector<1x256xf32> to vector<16x256xf32>
    %33 = arith.addf %30, %32 : vector<16x256xf32>
    %34 = vector.extract_strided_slice %33 {offsets = [0, 0], sizes = [16, 128], strides = [1, 1]} : vector<16x256xf32> to vector<16x128xf32>
    %35 = vector.extract_strided_slice %33 {offsets = [0, 128], sizes = [16, 128], strides = [1, 1]} : vector<16x256xf32> to vector<16x128xf32>
    %c0_24 = arith.constant 0 : index
    %c0_25 = arith.constant 0 : index
    %36 = vector.load %arg2[%c0_24, %c0_25] : memref<16x128xf32, #tpu.memory_space<vmem>>, vector<16x128xf32>
    %cst_26 = arith.constant 5.000000e-01 : f32
    %37 = vector.broadcast %cst_26 : f32 to vector<16x128xf32>
    %38 = arith.mulf %37, %35 : vector<16x128xf32>
    %39 = math.exp %38 : vector<16x128xf32>
    %40 = arith.mulf %36, %39 : vector<16x128xf32>
    %41 = arith.addf %34, %40 : vector<16x128xf32>
    %42 = arith.truncf %41 : vector<16x128xf32> to vector<16x128xbf16>
    %c0_27 = arith.constant 0 : index
    %c0_28 = arith.constant 0 : index
    %43 = vector.load %arg11[%c0_27, %c0_28] : memref<128x128xbf16, #tpu.memory_space<vmem>>, vector<128x128xbf16>
    %cst_29 = arith.constant dense<0.000000e+00> : vector<16x128xf32>
    %44 = tpu.matmul %42, %43, %cst_29 {dimension_numbers = #tpu.dot_dimension_numbers<[1], [0], [0], [1], [0, 0, 1, 1], [], []>} : vector<16x128xbf16>, vector<128x128xbf16>, vector<16x128xf32> -> vector<16x128xf32>
    %c0_30 = arith.constant 0 : index
    %c0_31 = arith.constant 0 : index
    %45 = vector.load %arg12[%c0_30, %c0_31] : memref<1x128xf32, #tpu.memory_space<vmem>>, vector<1x128xf32>
    %46 = vector.broadcast %45 : vector<1x128xf32> to vector<16x128xf32>
    %47 = arith.addf %44, %46 : vector<16x128xf32>
    %cst_32 = arith.constant 0.000000e+00 : f32
    %48 = vector.broadcast %cst_32 : f32 to vector<16x128xf32>
    %49 = arith.cmpf ogt, %47, %48 : vector<16x128xf32>
    %cst_33 = arith.constant 0.00999999977 : f32
    %50 = vector.broadcast %cst_33 : f32 to vector<16x128xf32>
    %51 = arith.mulf %50, %47 : vector<16x128xf32>
    %52 = arith.select %49, %47, %51 : vector<16x128xi1>, vector<16x128xf32>
    %53 = arith.truncf %52 : vector<16x128xf32> to vector<16x128xbf16>
    %c0_34 = arith.constant 0 : index
    %c0_35 = arith.constant 0 : index
    %54 = vector.load %arg13[%c0_34, %c0_35] : memref<128x128xbf16, #tpu.memory_space<vmem>>, vector<128x128xbf16>
    %cst_36 = arith.constant dense<0.000000e+00> : vector<16x128xf32>
    %55 = tpu.matmul %53, %54, %cst_36 {dimension_numbers = #tpu.dot_dimension_numbers<[1], [0], [0], [1], [0, 0, 1, 1], [], []>} : vector<16x128xbf16>, vector<128x128xbf16>, vector<16x128xf32> -> vector<16x128xf32>
    %c0_37 = arith.constant 0 : index
    %c0_38 = arith.constant 0 : index
    %56 = vector.load %arg14[%c0_37, %c0_38] : memref<1x128xf32, #tpu.memory_space<vmem>>, vector<1x128xf32>
    %57 = vector.broadcast %56 : vector<1x128xf32> to vector<16x128xf32>
    %58 = arith.addf %55, %57 : vector<16x128xf32>
    %cst_39 = arith.constant 0.000000e+00 : f32
    %59 = vector.broadcast %cst_39 : f32 to vector<16x128xf32>
    %60 = arith.cmpf ogt, %58, %59 : vector<16x128xf32>
    %cst_40 = arith.constant 0.00999999977 : f32
    %61 = vector.broadcast %cst_40 : f32 to vector<16x128xf32>
    %62 = arith.mulf %61, %58 : vector<16x128xf32>
    %63 = arith.select %60, %58, %62 : vector<16x128xi1>, vector<16x128xf32>
    %64 = arith.truncf %63 : vector<16x128xf32> to vector<16x128xbf16>
    %c0_41 = arith.constant 0 : index
    %c0_42 = arith.constant 0 : index
    %65 = vector.load %arg15[%c0_41, %c0_42] : memref<128x128xbf16, #tpu.memory_space<vmem>>, vector<128x128xbf16>
    %cst_43 = arith.constant dense<0.000000e+00> : vector<16x128xf32>
    %66 = tpu.matmul %64, %65, %cst_43 {dimension_numbers = #tpu.dot_dimension_numbers<[1], [0], [0], [1], [0, 0, 1, 1], [], []>} : vector<16x128xbf16>, vector<128x128xbf16>, vector<16x128xf32> -> vector<16x128xf32>
    %c0_44 = arith.constant 0 : index
    %c0_45 = arith.constant 0 : index
    %67 = vector.load %arg16[%c0_44, %c0_45] : memref<1x128xf32, #tpu.memory_space<vmem>>, vector<1x128xf32>
    %68 = vector.broadcast %67 : vector<1x128xf32> to vector<16x128xf32>
    %69 = arith.addf %66, %68 : vector<16x128xf32>
    %c0_46 = arith.constant 0 : index
    %c0_47 = arith.constant 0 : index
    %70 = vector.load %arg17[%c0_46, %c0_47] : memref<16x128xf32, #tpu.memory_space<vmem>>, vector<16x128xf32>
    tpu.vector_store %arg17[%c0_46, %c0_47], %69 {strides = array<i32>} : memref<16x128xf32, #tpu.memory_space<vmem>>, vector<16x128xf32>,
    %c0_48 = arith.constant 0 : index
    %c0_49 = arith.constant 0 : index
    %71 = vector.load %arg18[%c0_48, %c0_49] : memref<16x256xf32, #tpu.memory_space<vmem>>, vector<16x256xf32>
    tpu.vector_store %arg18[%c0_48, %c0_49], %33 {strides = array<i32>} : memref<16x256xf32, #tpu.memory_space<vmem>>, vector<16x256xf32>,
    return
  }
  func.func @transform_0(%arg0: i32) -> (i32, i32) {
    %c0_i32 = arith.constant 0 : i32
    %c0_i32_0 = arith.constant 0 : i32
    return %arg0, %c0_i32 : i32, i32
  }
  func.func @transform_1(%arg0: i32) -> (i32, i32) {
    %c0_i32 = arith.constant 0 : i32
    %c0_i32_0 = arith.constant 0 : i32
    return %arg0, %c0_i32 : i32, i32
  }
  func.func @transform_2(%arg0: i32) -> (i32, i32) {
    %c0_i32 = arith.constant 0 : i32
    %c0_i32_0 = arith.constant 0 : i32
    %c0_i32_1 = arith.constant 0 : i32
    return %c0_i32, %c0_i32_0 : i32, i32
  }
  func.func @transform_3(%arg0: i32) -> (i32, i32) {
    %c0_i32 = arith.constant 0 : i32
    %c0_i32_0 = arith.constant 0 : i32
    %c0_i32_1 = arith.constant 0 : i32
    return %c0_i32, %c0_i32_0 : i32, i32
  }
  func.func @transform_4(%arg0: i32) -> (i32, i32) {
    %c0_i32 = arith.constant 0 : i32
    %c0_i32_0 = arith.constant 0 : i32
    %c0_i32_1 = arith.constant 0 : i32
    return %c0_i32, %c0_i32_0 : i32, i32
  }
  func.func @transform_5(%arg0: i32) -> (i32, i32) {
    %c0_i32 = arith.constant 0 : i32
    %c0_i32_0 = arith.constant 0 : i32
    %c0_i32_1 = arith.constant 0 : i32
    return %c0_i32, %c0_i32_0 : i32, i32
  }
  func.func @transform_6(%arg0: i32) -> (i32, i32) {
    %c0_i32 = arith.constant 0 : i32
    %c0_i32_0 = arith.constant 0 : i32
    %c0_i32_1 = arith.constant 0 : i32
    return %c0_i32, %c0_i32_0 : i32, i32
  }
  func.func @transform_7(%arg0: i32) -> (i32, i32) {
    %c0_i32 = arith.constant 0 : i32
    %c0_i32_0 = arith.constant 0 : i32
    %c0_i32_1 = arith.constant 0 : i32
    return %c0_i32, %c0_i32_0 : i32, i32
  }
  func.func @transform_8(%arg0: i32) -> (i32, i32) {
    %c0_i32 = arith.constant 0 : i32
    %c0_i32_0 = arith.constant 0 : i32
    %c0_i32_1 = arith.constant 0 : i32
    return %c0_i32, %c0_i32_0 : i32, i32
  }
  func.func @transform_9(%arg0: i32) -> (i32, i32) {
    %c0_i32 = arith.constant 0 : i32
    %c0_i32_0 = arith.constant 0 : i32
    %c0_i32_1 = arith.constant 0 : i32
    return %c0_i32, %c0_i32_0 : i32, i32
  }
  func.func @transform_10(%arg0: i32) -> (i32, i32) {
    %c0_i32 = arith.constant 0 : i32
    %c0_i32_0 = arith.constant 0 : i32
    %c0_i32_1 = arith.constant 0 : i32
    return %c0_i32, %c0_i32_0 : i32, i32
  }
  func.func @transform_11(%arg0: i32) -> (i32, i32) {
    %c0_i32 = arith.constant 0 : i32
    %c0_i32_0 = arith.constant 0 : i32
    %c0_i32_1 = arith.constant 0 : i32
    return %c0_i32, %c0_i32_0 : i32, i32
  }
  func.func @transform_12(%arg0: i32) -> (i32, i32) {
    %c0_i32 = arith.constant 0 : i32
    %c0_i32_0 = arith.constant 0 : i32
    %c0_i32_1 = arith.constant 0 : i32
    return %c0_i32, %c0_i32_0 : i32, i32
  }
  func.func @transform_13(%arg0: i32) -> (i32, i32) {
    %c0_i32 = arith.constant 0 : i32
    %c0_i32_0 = arith.constant 0 : i32
    %c0_i32_1 = arith.constant 0 : i32
    return %c0_i32, %c0_i32_0 : i32, i32
  }
  func.func @transform_14(%arg0: i32) -> (i32, i32) {
    %c0_i32 = arith.constant 0 : i32
    %c0_i32_0 = arith.constant 0 : i32
    %c0_i32_1 = arith.constant 0 : i32
    return %c0_i32, %c0_i32_0 : i32, i32
  }
  func.func @transform_15(%arg0: i32) -> (i32, i32) {
    %c0_i32 = arith.constant 0 : i32
    %c0_i32_0 = arith.constant 0 : i32
    %c0_i32_1 = arith.constant 0 : i32
    return %c0_i32, %c0_i32_0 : i32, i32
  }
  func.func @transform_16(%arg0: i32) -> (i32, i32) {
    %c0_i32 = arith.constant 0 : i32
    %c0_i32_0 = arith.constant 0 : i32
    return %arg0, %c0_i32 : i32, i32
  }
  func.func @transform_17(%arg0: i32) -> (i32, i32) {
    %c0_i32 = arith.constant 0 : i32
    %c0_i32_0 = arith.constant 0 : i32
    return %arg0, %c0_i32 : i32, i32
  }
}

</mosaic_0001>

<llo_original>
// kernel: tpu_custom_call.1
$region0: #{tpu_custom_call.1}
  #allocation0 [shape = 'u32[]', space=smem, size = 0x4, offset = 0x4, fixed_abs, tag = 'smem constant byte address 0x4 - core index']
  #allocation1 [shape = 'u32[144,128]{1,0:T(1,128)}', space=vmem, size = 0x12000, scoped, tag = 'internal scratch']
  %s0 = inlined_call_operand.hbm [shape: bf16[16,128], index: 0, kind: input, shape index: {}]
  %s1 = inlined_call_operand.hbm [shape: f32[16,128], index: 1, kind: input, shape index: {}]
  %s2 = inlined_call_operand.hbm [shape: bf16[128,128], index: 2, kind: input, shape index: {}]
  %s3 = inlined_call_operand.vmem [shape: f32[1,128], index: 3, kind: input, shape index: {}]
  %s4 = inlined_call_operand.hbm [shape: bf16[128,128], index: 4, kind: input, shape index: {}]
  %s5 = inlined_call_operand.vmem [shape: f32[1,128], index: 5, kind: input, shape index: {}]
  %s6 = inlined_call_operand.hbm [shape: bf16[128,128], index: 6, kind: input, shape index: {}]
  %s7 = inlined_call_operand.vmem [shape: f32[1,128], index: 7, kind: input, shape index: {}]
  %s8 = inlined_call_operand.hbm [shape: bf16[128,256], index: 8, kind: input, shape index: {}]
  %s9 = inlined_call_operand.vmem [shape: f32[1,256], index: 9, kind: input, shape index: {}]
  %s10 = inlined_call_operand.hbm [shape: bf16[128,128], index: 10, kind: input, shape index: {}]
  %s11 = inlined_call_operand.vmem [shape: f32[1,128], index: 11, kind: input, shape index: {}]
  %s12 = inlined_call_operand.hbm [shape: bf16[128,128], index: 12, kind: input, shape index: {}]
  %s13 = inlined_call_operand.vmem [shape: f32[1,128], index: 13, kind: input, shape index: {}]
  %s14 = inlined_call_operand.hbm [shape: bf16[128,128], index: 14, kind: input, shape index: {}]
  %s15 = inlined_call_operand.vmem [shape: f32[1,128], index: 15, kind: input, shape index: {}]
  %s16 = inlined_call_operand.hbm [shape: f32[16,128], index: 16, kind: output, shape index: {0}]
  %s17 = inlined_call_operand.hbm [shape: f32[16,256], index: 17, kind: output, shape index: {1}]
  %18 = xla_tuple %s16, %s17
  %s19 = sld [smem:[#allocation0]]
  $region118: #{tpu_custom_call.1} parent=0
    _
  %s21 = ssub.s32 1, %s19
  %s22 = scalar_select 0, %s21, %s19
  $region1: #{tpu_custom_call.1} parent=0
    #allocation2 [shape = 'u8[4096]{0}', space=vmem, size = 0x1000, scoped, tag = 'input window, operand 0, single buffered']
    #allocation3 [shape = 's32[1]{0}', space=sflag, size = 0x4, scoped, tag = 'scoped memory for tpu_custom_call.1']
    #allocation4 [shape = 's32[1]{0}', space=sflag, size = 0x4, scoped, tag = 'scoped memory for tpu_custom_call.1']
    #allocation5 [shape = 'u8[8192]{0}', space=vmem, size = 0x2000, scoped, tag = 'input window, operand 1, single buffered']
    #allocation6 [shape = 's32[1]{0}', space=sflag, size = 0x4, scoped, tag = 'scoped memory for tpu_custom_call.1']
    #allocation7 [shape = 'u8[32768]{0}', space=vmem, size = 0x8000, scoped, tag = 'input window, operand 2, single buffered']
    #allocation8 [shape = 'u8[32768]{0}', space=vmem, size = 0x8000, scoped, tag = 'input window, operand 4, single buffered']
    #allocation9 [shape = 's32[1]{0}', space=sflag, size = 0x4, scoped, tag = 'scoped memory for tpu_custom_call.1']
    #allocation10 [shape = 'u8[32768]{0}', space=vmem, size = 0x8000, scoped, tag = 'input window, operand 6, single buffered']
    #allocation11 [shape = 'u8[65536]{0}', space=vmem, size = 0x10000, scoped, tag = 'input window, operand 8, single buffered']
    #allocation12 [shape = 's32[1]{0}', space=sflag, size = 0x4, scoped, tag = 'scoped memory for tpu_custom_call.1']
    #allocation13 [shape = 'u8[32768]{0}', space=vmem, size = 0x8000, scoped, tag = 'input window, operand 10, single buffered']
    #allocation14 [shape = 'u8[32768]{0}', space=vmem, size = 0x8000, scoped, tag = 'input window, operand 12, single buffered']
    #allocation15 [shape = 's32[1]{0}', space=sflag, size = 0x4, scoped, tag = 'scoped memory for tpu_custom_call.1']
    #allocation16 [shape = 'u8[32768]{0}', space=vmem, size = 0x8000, scoped, tag = 'input window, operand 14, single buffered']
    #allocation17 [shape = 'u8[8192]{0}', space=vmem, size = 0x2000, scoped, tag = 'output window, operand 0, single buffered']
    #allocation18 [shape = 'u8[16384]{0}', space=vmem, size = 0x4000, scoped, tag = 'output window, operand 1, single buffered']
    #allocation19 [shape = 's32[1]{0}', space=sflag, size = 0x4, scoped, tag = 'scoped memory for tpu_custom_call.1']
    %23 = vsyncpa [#allocation3], 0
    %24 = vsyncpa [#allocation6], 0
    %25 = vsyncpa [#allocation9], 0
    %26 = vsyncpa [#allocation12], 0
    %27 = vsyncpa [#allocation15], 0
    %28 = vsyncpa [#allocation4], 0
    %29 = vsyncpa [#allocation19], 0
    // Predicated region
    $region2: #{tpu_custom_call.1} parent=1 // pred_check
      _
    $region3: #{tpu_custom_call.1} parent=1 // pred_check_branch
      %31 = sbr.rel (0) target = $region5
    $region4: #{tpu_custom_call.1} parent=1 // pred_region
      %s33 = ssub.s32 128, 128
      %34 = vsyncadd [#allocation3], %s33
      %s35 = sshll.u32 [#allocation2], 4
      %s36 = int_to_ptr.vmem [resolvable:$true] %s35
      %41 = dma.hbm_to_vmem [thread:$0]  %s0, 128, %s36, [#allocation3], 64, 64, 4
    $region5: #{tpu_custom_call.1} parent=1 // pred_fallthru
      _
    // Predicated region
    $region6: #{tpu_custom_call.1} parent=1 // pred_check
      _
    $region7: #{tpu_custom_call.1} parent=1 // pred_check_branch
      %43 = sbr.rel (0) target = $region9
    $region8: #{tpu_custom_call.1} parent=1 // pred_region
      %s45 = ssub.s32 256, 256
      %46 = vsyncadd [#allocation6], %s45
      %s47 = sshll.u32 [#allocation5], 4
      %s48 = int_to_ptr.vmem [resolvable:$true] %s47
      %53 = dma.hbm_to_vmem [thread:$0]  %s1, 256, %s48, [#allocation6], 128, 128, 8
    $region9: #{tpu_custom_call.1} parent=1 // pred_fallthru
      _
    // Predicated region
    $region10: #{tpu_custom_call.1} parent=1 // pred_check
      _
    $region11: #{tpu_custom_call.1} parent=1 // pred_check_branch
      %55 = sbr.rel (0) target = $region13
    $region12: #{tpu_custom_call.1} parent=1 // pred_region
      %s57 = ssub.s32 1024, 1024
      %58 = vsyncadd [#allocation6], %s57
      %s59 = sshll.u32 [#allocation7], 4
      %s60 = int_to_ptr.vmem [resolvable:$true] %s59
      %65 = dma.hbm_to_vmem [thread:$0]  %s2, 1024, %s60, [#allocation6], 64, 64, 4
    $region13: #{tpu_custom_call.1} parent=1 // pred_fallthru
      _
    // Predicated region
    $region14: #{tpu_custom_call.1} parent=1 // pred_check
      _
    $region15: #{tpu_custom_call.1} parent=1 // pred_check_branch
      %67 = sbr.rel (0) target = $region17
    $region16: #{tpu_custom_call.1} parent=1 // pred_region
      _
    $region17: #{tpu_custom_call.1} parent=1 // pred_fallthru
      _
    // Predicated region
    $region18: #{tpu_custom_call.1} parent=1 // pred_check
      _
    $region19: #{tpu_custom_call.1} parent=1 // pred_check_branch
      %69 = sbr.rel (0) target = $region21
    $region20: #{tpu_custom_call.1} parent=1 // pred_region
      %s71 = ssub.s32 1024, 1024
      %72 = vsyncadd [#allocation9], %s71
      %s73 = sshll.u32 [#allocation8], 4
      %s74 = int_to_ptr.vmem [resolvable:$true] %s73
      %79 = dma.hbm_to_vmem [thread:$0]  %s4, 1024, %s74, [#allocation9], 64, 64, 4
    $region21: #{tpu_custom_call.1} parent=1 // pred_fallthru
      _
    // Predicated region
    $region22: #{tpu_custom_call.1} parent=1 // pred_check
      _
    $region23: #{tpu_custom_call.1} parent=1 // pred_check_branch
      %81 = sbr.rel (0) target = $region25
    $region24: #{tpu_custom_call.1} parent=1 // pred_region
      _
    $region25: #{tpu_custom_call.1} parent=1 // pred_fallthru
      _
    // Predicated region
    $region26: #{tpu_custom_call.1} parent=1 // pred_check
      _
    $region27: #{tpu_custom_call.1} parent=1 // pred_check_branch
      %83 = sbr.rel (0) target = $region29
    $region28: #{tpu_custom_call.1} parent=1 // pred_region
      %s85 = ssub.s32 1024, 1024
      %86 = vsyncadd [#allocation9], %s85
      %s87 = sshll.u32 [#allocation10], 4
      %s88 = int_to_ptr.vmem [resolvable:$true] %s87
      %93 = dma.hbm_to_vmem [thread:$0]  %s6, 1024, %s88, [#allocation9], 64, 64, 4
    $region29: #{tpu_custom_call.1} parent=1 // pred_fallthru
      _
    // Predicated region
    $region30: #{tpu_custom_call.1} parent=1 // pred_check
      _
    $region31: #{tpu_custom_call.1} parent=1 // pred_check_branch
      %95 = sbr.rel (0) target = $region33
    $region32: #{tpu_custom_call.1} parent=1 // pred_region
      _
    $region33: #{tpu_custom_call.1} parent=1 // pred_fallthru
      _
    // Predicated region
    $region34: #{tpu_custom_call.1} parent=1 // pred_check
      _
    $region35: #{tpu_custom_call.1} parent=1 // pred_check_branch
      %97 = sbr.rel (0) target = $region37
    $region36: #{tpu_custom_call.1} parent=1 // pred_region
      %s99 = ssub.s32 2048, 2048
      %100 = vsyncadd [#allocation12], %s99
      %s101 = sshll.u32 [#allocation11], 4
      %s102 = int_to_ptr.vmem [resolvable:$true] %s101
      %107 = dma.hbm_to_vmem [thread:$0]  %s8, 2048, %s102, [#allocation12], 128, 128, 8
    $region37: #{tpu_custom_call.1} parent=1 // pred_fallthru
      _
    // Predicated region
    $region38: #{tpu_custom_call.1} parent=1 // pred_check
      _
    $region39: #{tpu_custom_call.1} parent=1 // pred_check_branch
      %109 = sbr.rel (0) target = $region41
    $region40: #{tpu_custom_call.1} parent=1 // pred_region
      _
    $region41: #{tpu_custom_call.1} parent=1 // pred_fallthru
      _
    // Predicated region
    $region42: #{tpu_custom_call.1} parent=1 // pred_check
      _
    $region43: #{tpu_custom_call.1} parent=1 // pred_check_branch
      %111 = sbr.rel (0) target = $region45
    $region44: #{tpu_custom_call.1} parent=1 // pred_region
      %s113 = ssub.s32 1024, 1024
      %114 = vsyncadd [#allocation12], %s113
      %s115 = sshll.u32 [#allocation13], 4
      %s116 = int_to_ptr.vmem [resolvable:$true] %s115
      %121 = dma.hbm_to_vmem [thread:$0]  %s10, 1024, %s116, [#allocation12], 64, 64, 4
    $region45: #{tpu_custom_call.1} parent=1 // pred_fallthru
      _
    // Predicated region
    $region46: #{tpu_custom_call.1} parent=1 // pred_check
      _
    $region47: #{tpu_custom_call.1} parent=1 // pred_check_branch
      %123 = sbr.rel (0) target = $region49
    $region48: #{tpu_custom_call.1} parent=1 // pred_region
      _
    $region49: #{tpu_custom_call.1} parent=1 // pred_fallthru
      _
    // Predicated region
    $region50: #{tpu_custom_call.1} parent=1 // pred_check
      _
    $region51: #{tpu_custom_call.1} parent=1 // pred_check_branch
      %125 = sbr.rel (0) target = $region53
    $region52: #{tpu_custom_call.1} parent=1 // pred_region
      %s127 = ssub.s32 1024, 1024
      %128 = vsyncadd [#allocation15], %s127
      %s129 = sshll.u32 [#allocation14], 4
      %s130 = int_to_ptr.vmem [resolvable:$true] %s129
      %135 = dma.hbm_to_vmem [thread:$0]  %s12, 1024, %s130, [#allocation15], 64, 64, 4
    $region53: #{tpu_custom_call.1} parent=1 // pred_fallthru
      _
    // Predicated region
    $region54: #{tpu_custom_call.1} parent=1 // pred_check
      _
    $region55: #{tpu_custom_call.1} parent=1 // pred_check_branch
      %137 = sbr.rel (0) target = $region57
    $region56: #{tpu_custom_call.1} parent=1 // pred_region
      _
    $region57: #{tpu_custom_call.1} parent=1 // pred_fallthru
      _
    // Predicated region
    $region58: #{tpu_custom_call.1} parent=1 // pred_check
      _
    $region59: #{tpu_custom_call.1} parent=1 // pred_check_branch
      %139 = sbr.rel (0) target = $region61
    $region60: #{tpu_custom_call.1} parent=1 // pred_region
      %s141 = ssub.s32 1024, 1024
      %142 = vsyncadd [#allocation15], %s141
      %s143 = sshll.u32 [#allocation16], 4
      %s144 = int_to_ptr.vmem [resolvable:$true] %s143
      %149 = dma.hbm_to_vmem [thread:$0]  %s14, 1024, %s144, [#allocation15], 64, 64, 4
    $region61: #{tpu_custom_call.1} parent=1 // pred_fallthru
      _
    // Predicated region
    $region62: #{tpu_custom_call.1} parent=1 // pred_check
      _
    $region63: #{tpu_custom_call.1} parent=1 // pred_check_branch
      %151 = sbr.rel (0) target = $region65
    $region64: #{tpu_custom_call.1} parent=1 // pred_region
      _
    $region65: #{tpu_custom_call.1} parent=1 // pred_fallthru
      _
    // Predicated region
    $region66: #{tpu_custom_call.1} parent=1 // pred_check
      _
    $region67: #{tpu_custom_call.1} parent=1 // pred_check_branch
      %153 = sbr.rel (0) target = $region69
    $region68: #{tpu_custom_call.1} parent=1 // pred_region
      %154 = dma.done [#allocation3], 128
    $region69: #{tpu_custom_call.1} parent=1 // pred_fallthru
      _
    // Predicated region
    $region70: #{tpu_custom_call.1} parent=1 // pred_check
      _
    $region71: #{tpu_custom_call.1} parent=1 // pred_check_branch
      %156 = sbr.rel (0) target = $region73
    $region72: #{tpu_custom_call.1} parent=1 // pred_region
      %157 = dma.done [#allocation6], 256
    $region73: #{tpu_custom_call.1} parent=1 // pred_fallthru
      _
    // Predicated region
    $region74: #{tpu_custom_call.1} parent=1 // pred_check
      _
    $region75: #{tpu_custom_call.1} parent=1 // pred_check_branch
      %159 = sbr.rel (0) target = $region77
    $region76: #{tpu_custom_call.1} parent=1 // pred_region
      %160 = dma.done [#allocation6], 1024
    $region77: #{tpu_custom_call.1} parent=1 // pred_fallthru
      _
    // Predicated region
    $region78: #{tpu_custom_call.1} parent=1 // pred_check
      _
    $region79: #{tpu_custom_call.1} parent=1 // pred_check_branch
      %162 = sbr.rel (0) target = $region81
    $region80: #{tpu_custom_call.1} parent=1 // pred_region
      %163 = dma.done [#allocation9], 1024
    $region81: #{tpu_custom_call.1} parent=1 // pred_fallthru
      _
    // Predicated region
    $region82: #{tpu_custom_call.1} parent=1 // pred_check
      _
    $region83: #{tpu_custom_call.1} parent=1 // pred_check_branch
      %165 = sbr.rel (0) target = $region85
    $region84: #{tpu_custom_call.1} parent=1 // pred_region
      %166 = dma.done [#allocation9], 1024
    $region85: #{tpu_custom_call.1} parent=1 // pred_fallthru
      _
    // Predicated region
    $region86: #{tpu_custom_call.1} parent=1 // pred_check
      _
    $region87: #{tpu_custom_call.1} parent=1 // pred_check_branch
      %168 = sbr.rel (0) target = $region89
    $region88: #{tpu_custom_call.1} parent=1 // pred_region
      %169 = dma.done [#allocation12], 2048
    $region89: #{tpu_custom_call.1} parent=1 // pred_fallthru
      _
    // Predicated region
    $region90: #{tpu_custom_call.1} parent=1 // pred_check
      _
    $region91: #{tpu_custom_call.1} parent=1 // pred_check_branch
      %171 = sbr.rel (0) target = $region93
    $region92: #{tpu_custom_call.1} parent=1 // pred_region
      %172 = dma.done [#allocation12], 1024
    $region93: #{tpu_custom_call.1} parent=1 // pred_fallthru
      _
    // Predicated region
    $region94: #{tpu_custom_call.1} parent=1 // pred_check
      _
    $region95: #{tpu_custom_call.1} parent=1 // pred_check_branch
      %174 = sbr.rel (0) target = $region97
    $region96: #{tpu_custom_call.1} parent=1 // pred_region
      %175 = dma.done [#allocation15], 1024
    $region97: #{tpu_custom_call.1} parent=1 // pred_fallthru
      _
    // Predicated region
    $region98: #{tpu_custom_call.1} parent=1 // pred_check
      _
    $region99: #{tpu_custom_call.1} parent=1 // pred_check_branch
      %177 = sbr.rel (0) target = $region101
    $region100: #{tpu_custom_call.1} parent=1 // pred_region
      %178 = dma.done [#allocation15], 1024
    $region101: #{tpu_custom_call.1} parent=1 // pred_fallthru
      _
    %v180 = vld [vmem:[#allocation2] sm:$0xf]
    %v181 = vld [vmem:[#allocation2 + $0x4] sm:$0xf]
    %v182 = vld [vmem:[#allocation7] sm:$0xf]
    %v183 = vld [vmem:[#allocation7 + $0x4] sm:$0xf]
    %v184 = vld [vmem:[#allocation7 + $0x8] sm:$0xf]
    %v185 = vld [vmem:[#allocation7 + $0xc] sm:$0xf]
    %v186 = vld [vmem:[#allocation7 + $0x10] sm:$0xf]
    %v187 = vld [vmem:[#allocation7 + $0x14] sm:$0xf]
    %v188 = vld [vmem:[#allocation7 + $0x18] sm:$0xf]
    %v189 = vld [vmem:[#allocation7 + $0x1c] sm:$0xf]
    %v190 = vld [vmem:[#allocation7 + $0x20] sm:$0xf]
    %v191 = vld [vmem:[#allocation7 + $0x24] sm:$0xf]
    %v192 = vld [vmem:[#allocation7 + $0x28] sm:$0xf]
    %v193 = vld [vmem:[#allocation7 + $0x2c] sm:$0xf]
    %v194 = vld [vmem:[#allocation7 + $0x30] sm:$0xf]
    %v195 = vld [vmem:[#allocation7 + $0x34] sm:$0xf]
    %v196 = vld [vmem:[#allocation7 + $0x38] sm:$0xf]
    %v197 = vld [vmem:[#allocation7 + $0x3c] sm:$0xf]
    %v198 = vld [vmem:[%s3] sm:$0x1]
    %v200 = vlaneseq
    %v201 = vshrl.u32 %v200, 7
    %v202 = vsub.s32 0, %v201
    %v203 = vrot.slane %v198, %v202
    %v207 = vunpack.c.l.b16 %v180
    %v208 = vunpack.c.l.b16 %v181
    %v209 = vpack.c.b16 %v208, %v207
    %v227 = vunpack.c.l.b16 %v182
    %v228 = vunpack.c.l.b16 %v183
    %v229 = vunpack.c.l.b16 %v184
    %v230 = vunpack.c.l.b16 %v185
    %v231 = vunpack.c.l.b16 %v186
    %v232 = vunpack.c.l.b16 %v187
    %v233 = vunpack.c.l.b16 %v188
    %v234 = vunpack.c.l.b16 %v189
    %v235 = vunpack.c.l.b16 %v190
    %v236 = vunpack.c.l.b16 %v191
    %v237 = vunpack.c.l.b16 %v192
    %v238 = vunpack.c.l.b16 %v193
    %v239 = vunpack.c.l.b16 %v194
    %v240 = vunpack.c.l.b16 %v195
    %v241 = vunpack.c.l.b16 %v196
    %v242 = vunpack.c.l.b16 %v197
    %v243 = vpack.c.b16 %v228, %v227
    %v244 = vpack.c.b16 %v230, %v229
    %v245 = vpack.c.b16 %v232, %v231
    %v246 = vpack.c.b16 %v234, %v233
    %v247 = vpack.c.b16 %v236, %v235
    %v248 = vpack.c.b16 %v238, %v237
    %v249 = vpack.c.b16 %v240, %v239
    %v250 = vpack.c.b16 %v242, %v241
    %259 = vmatprep.subr.bf16.mxu0 0
    %260 = vmatpush1.bf16.msra.mxu0 %v243
    %261 = vmatprep.subr.bf16.mxu0 0
    %262 = vmatpush1.bf16.msra.mxu0 %v244
    %263 = vmatprep.subr.bf16.mxu0 0
    %264 = vmatpush1.bf16.msra.mxu0 %v245
    %265 = vmatprep.subr.bf16.mxu0 0
    %266 = vmatpush1.bf16.msra.mxu0 %v246
    %267 = vmatprep.subr.bf16.mxu0 0
    %268 = vmatpush1.bf16.msra.mxu0 %v247
    %269 = vmatprep.subr.bf16.mxu0 0
    %270 = vmatpush1.bf16.msra.mxu0 %v248
    %271 = vmatprep.subr.bf16.mxu0 0
    %272 = vmatpush1.bf16.msra.mxu0 %v249
    %273 = vmatprep.subr.bf16.mxu0 0
    %274 = vmatpush1.bf16.msra.mxu0 %v250
    %275 = vmatprep.subr.bf16.mxu0 0
    %276 = vmatpush1.bf16.msra.mxu0 0
    %277 = vmatprep.subr.bf16.mxu0 0
    %278 = vmatpush1.bf16.msra.mxu0 0
    %279 = vmatprep.subr.bf16.mxu0 0
    %280 = vmatpush1.bf16.msra.mxu0 0
    %281 = vmatprep.subr.bf16.mxu0 0
    %282 = vmatpush1.bf16.msra.mxu0 0
    %283 = vmatprep.subr.bf16.mxu0 0
    %284 = vmatpush1.bf16.msra.mxu0 0
    %285 = vmatprep.subr.bf16.mxu0 0
    %286 = vmatpush1.bf16.msra.mxu0 0
    %287 = vmatprep.subr.bf16.mxu0 0
    %288 = vmatpush1.bf16.msra.mxu0 0
    %289 = vmatprep.subr.bf16.mxu0 0
    %290 = vmatpush1.bf16.msra.mxu0 0
    %291 = vmatprep.mubr.bf16.mxu0 0
    %292 = vmatmul.mubr.bf16.gmra.mrb[0].mxu0 %v209
    %v293 = vpop.f32.mrb[0].mxu0
    %v294 = vadd.f32 %v203, %v293
    %v295 = vpop.f32.mrb[0].mxu0
    %v296 = vpop.f32.mrb[0].mxu0
    %v297 = vadd.f32 %v203, %v296
    %v298 = vpop.f32.mrb[0].mxu0
    %299 = vdwg.mxu0
    %vm300 = vcmp.gt.f32.partialorder %v294, 0.0
    %vm301 = vcmp.gt.f32.partialorder %v297, 0.0
    %v302 = vmul.f32 %v294, 0.01
    %v303 = vmul.f32 %v297, 0.01
    %v304 = vsel %vm300, %v294, %v302
    %v305 = vsel %vm301, %v297, %v303
    %v306 = vpack.c.bf16 %v305, %v304
    %v307 = vld [vmem:[#allocation8] sm:$0xf]
    %v308 = vld [vmem:[#allocation8 + $0x4] sm:$0xf]
    %v309 = vld [vmem:[#allocation8 + $0x8] sm:$0xf]
    %v310 = vld [vmem:[#allocation8 + $0xc] sm:$0xf]
    %v311 = vld [vmem:[#allocation8 + $0x10] sm:$0xf]
    %v312 = vld [vmem:[#allocation8 + $0x14] sm:$0xf]
    %v313 = vld [vmem:[#allocation8 + $0x18] sm:$0xf]
    %v314 = vld [vmem:[#allocation8 + $0x1c] sm:$0xf]
    %v315 = vld [vmem:[#allocation8 + $0x20] sm:$0xf]
    %v316 = vld [vmem:[#allocation8 + $0x24] sm:$0xf]
    %v317 = vld [vmem:[#allocation8 + $0x28] sm:$0xf]
    %v318 = vld [vmem:[#allocation8 + $0x2c] sm:$0xf]
    %v319 = vld [vmem:[#allocation8 + $0x30] sm:$0xf]
    %v320 = vld [vmem:[#allocation8 + $0x34] sm:$0xf]
    %v321 = vld [vmem:[#allocation8 + $0x38] sm:$0xf]
    %v322 = vld [vmem:[#allocation8 + $0x3c] sm:$0xf]
    %v323 = vld [vmem:[%s5] sm:$0x1]
    %v325 = vlaneseq
    %v326 = vshrl.u32 %v325, 7
    %v327 = vsub.s32 0, %v326
    %v328 = vrot.slane %v323, %v327
    %v346 = vunpack.c.l.b16 %v307
    %v347 = vunpack.c.l.b16 %v308
    %v348 = vunpack.c.l.b16 %v309
    %v349 = vunpack.c.l.b16 %v310
    %v350 = vunpack.c.l.b16 %v311
    %v351 = vunpack.c.l.b16 %v312
    %v352 = vunpack.c.l.b16 %v313
    %v353 = vunpack.c.l.b16 %v314
    %v354 = vunpack.c.l.b16 %v315
    %v355 = vunpack.c.l.b16 %v316
    %v356 = vunpack.c.l.b16 %v317
    %v357 = vunpack.c.l.b16 %v318
    %v358 = vunpack.c.l.b16 %v319
    %v359 = vunpack.c.l.b16 %v320
    %v360 = vunpack.c.l.b16 %v321
    %v361 = vunpack.c.l.b16 %v322
    %v362 = vpack.c.b16 %v347, %v346
    %v363 = vpack.c.b16 %v349, %v348
    %v364 = vpack.c.b16 %v351, %v350
    %v365 = vpack.c.b16 %v353, %v352
    %v366 = vpack.c.b16 %v355, %v354
    %v367 = vpack.c.b16 %v357, %v356
    %v368 = vpack.c.b16 %v359, %v358
    %v369 = vpack.c.b16 %v361, %v360
    %378 = vmatprep.subr.bf16.mxu0 0
    %379 = vmatpush1.bf16.msra.mxu0 %v362
    %380 = vmatprep.subr.bf16.mxu0 0
    %381 = vmatpush1.bf16.msra.mxu0 %v363
    %382 = vmatprep.subr.bf16.mxu0 0
    %383 = vmatpush1.bf16.msra.mxu0 %v364
    %384 = vmatprep.subr.bf16.mxu0 0
    %385 = vmatpush1.bf16.msra.mxu0 %v365
    %386 = vmatprep.subr.bf16.mxu0 0
    %387 = vmatpush1.bf16.msra.mxu0 %v366
    %388 = vmatprep.subr.bf16.mxu0 0
    %389 = vmatpush1.bf16.msra.mxu0 %v367
    %390 = vmatprep.subr.bf16.mxu0 0
    %391 = vmatpush1.bf16.msra.mxu0 %v368
    %392 = vmatprep.subr.bf16.mxu0 0
    %393 = vmatpush1.bf16.msra.mxu0 %v369
    %394 = vmatprep.subr.bf16.mxu0 0
    %395 = vmatpush1.bf16.msra.mxu0 0
    %396 = vmatprep.subr.bf16.mxu0 0
    %397 = vmatpush1.bf16.msra.mxu0 0
    %398 = vmatprep.subr.bf16.mxu0 0
    %399 = vmatpush1.bf16.msra.mxu0 0
    %400 = vmatprep.subr.bf16.mxu0 0
    %401 = vmatpush1.bf16.msra.mxu0 0
    %402 = vmatprep.subr.bf16.mxu0 0
    %403 = vmatpush1.bf16.msra.mxu0 0
    %404 = vmatprep.subr.bf16.mxu0 0
    %405 = vmatpush1.bf16.msra.mxu0 0
    %406 = vmatprep.subr.bf16.mxu0 0
    %407 = vmatpush1.bf16.msra.mxu0 0
    %408 = vmatprep.subr.bf16.mxu0 0
    %409 = vmatpush1.bf16.msra.mxu0 0
    %410 = vmatprep.mubr.bf16.mxu0 0
    %411 = vmatmul.mubr.bf16.gmra.mrb[0].mxu0 %v306
    %v412 = vpop.f32.mrb[0].mxu0
    %v413 = vadd.f32 %v328, %v412
    %v414 = vpop.f32.mrb[0].mxu0
    %v415 = vpop.f32.mrb[0].mxu0
    %v416 = vadd.f32 %v328, %v415
    %v417 = vpop.f32.mrb[0].mxu0
    %418 = vdwg.mxu0
    %vm419 = vcmp.gt.f32.partialorder %v413, 0.0
    %vm420 = vcmp.gt.f32.partialorder %v416, 0.0
    %v421 = vmul.f32 %v413, 0.01
    %v422 = vmul.f32 %v416, 0.01
    %v423 = vsel %vm419, %v413, %v421
    %v424 = vsel %vm420, %v416, %v422
    %v425 = vpack.c.bf16 %v424, %v423
    %v426 = vld [vmem:[#allocation10] sm:$0xf]
    %v427 = vld [vmem:[#allocation10 + $0x4] sm:$0xf]
    %v428 = vld [vmem:[#allocation10 + $0x8] sm:$0xf]
    %v429 = vld [vmem:[#allocation10 + $0xc] sm:$0xf]
    %v430 = vld [vmem:[#allocation10 + $0x10] sm:$0xf]
    %v431 = vld [vmem:[#allocation10 + $0x14] sm:$0xf]
    %v432 = vld [vmem:[#allocation10 + $0x18] sm:$0xf]
    %v433 = vld [vmem:[#allocation10 + $0x1c] sm:$0xf]
    %v434 = vld [vmem:[#allocation10 + $0x20] sm:$0xf]
    %v435 = vld [vmem:[#allocation10 + $0x24] sm:$0xf]
    %v436 = vld [vmem:[#allocation10 + $0x28] sm:$0xf]
    %v437 = vld [vmem:[#allocation10 + $0x2c] sm:$0xf]
    %v438 = vld [vmem:[#allocation10 + $0x30] sm:$0xf]
    %v439 = vld [vmem:[#allocation10 + $0x34] sm:$0xf]
    %v440 = vld [vmem:[#allocation10 + $0x38] sm:$0xf]
    %v441 = vld [vmem:[#allocation10 + $0x3c] sm:$0xf]
    %v442 = vld [vmem:[%s7] sm:$0x1]
    %v444 = vlaneseq
    %v445 = vshrl.u32 %v444, 7
    %v446 = vsub.s32 0, %v445
    %v447 = vrot.slane %v442, %v446
    %v465 = vunpack.c.l.b16 %v426
    %v466 = vunpack.c.l.b16 %v427
    %v467 = vunpack.c.l.b16 %v428
    %v468 = vunpack.c.l.b16 %v429
    %v469 = vunpack.c.l.b16 %v430
    %v470 = vunpack.c.l.b16 %v431
    %v471 = vunpack.c.l.b16 %v432
    %v472 = vunpack.c.l.b16 %v433
    %v473 = vunpack.c.l.b16 %v434
    %v474 = vunpack.c.l.b16 %v435
    %v475 = vunpack.c.l.b16 %v436
    %v476 = vunpack.c.l.b16 %v437
    %v477 = vunpack.c.l.b16 %v438
    %v478 = vunpack.c.l.b16 %v439
    %v479 = vunpack.c.l.b16 %v440
    %v480 = vunpack.c.l.b16 %v441
    %v481 = vpack.c.b16 %v466, %v465
    %v482 = vpack.c.b16 %v468, %v467
    %v483 = vpack.c.b16 %v470, %v469
    %v484 = vpack.c.b16 %v472, %v471
    %v485 = vpack.c.b16 %v474, %v473
    %v486 = vpack.c.b16 %v476, %v475
    %v487 = vpack.c.b16 %v478, %v477
    %v488 = vpack.c.b16 %v480, %v479
    %497 = vmatprep.subr.bf16.mxu0 0
    %498 = vmatpush1.bf16.msra.mxu0 %v481
    %499 = vmatprep.subr.bf16.mxu0 0
    %500 = vmatpush1.bf16.msra.mxu0 %v482
    %501 = vmatprep.subr.bf16.mxu0 0
    %502 = vmatpush1.bf16.msra.mxu0 %v483
    %503 = vmatprep.subr.bf16.mxu0 0
    %504 = vmatpush1.bf16.msra.mxu0 %v484
    %505 = vmatprep.subr.bf16.mxu0 0
    %506 = vmatpush1.bf16.msra.mxu0 %v485
    %507 = vmatprep.subr.bf16.mxu0 0
    %508 = vmatpush1.bf16.msra.mxu0 %v486
    %509 = vmatprep.subr.bf16.mxu0 0
    %510 = vmatpush1.bf16.msra.mxu0 %v487
    %511 = vmatprep.subr.bf16.mxu0 0
    %512 = vmatpush1.bf16.msra.mxu0 %v488
    %513 = vmatprep.subr.bf16.mxu0 0
    %514 = vmatpush1.bf16.msra.mxu0 0
    %515 = vmatprep.subr.bf16.mxu0 0
    %516 = vmatpush1.bf16.msra.mxu0 0
    %517 = vmatprep.subr.bf16.mxu0 0
    %518 = vmatpush1.bf16.msra.mxu0 0
    %519 = vmatprep.subr.bf16.mxu0 0
    %520 = vmatpush1.bf16.msra.mxu0 0
    %521 = vmatprep.subr.bf16.mxu0 0
    %522 = vmatpush1.bf16.msra.mxu0 0
    %523 = vmatprep.subr.bf16.mxu0 0
    %524 = vmatpush1.bf16.msra.mxu0 0
    %525 = vmatprep.subr.bf16.mxu0 0
    %526 = vmatpush1.bf16.msra.mxu0 0
    %527 = vmatprep.subr.bf16.mxu0 0
    %528 = vmatpush1.bf16.msra.mxu0 0
    %529 = vmatprep.mubr.bf16.mxu0 0
    %530 = vmatmul.mubr.bf16.gmra.mrb[0].mxu0 %v425
    %v531 = vpop.f32.mrb[0].mxu0
    %v532 = vadd.f32 %v447, %v531
    %v533 = vpop.f32.mrb[0].mxu0
    %v534 = vpop.f32.mrb[0].mxu0
    %v535 = vadd.f32 %v447, %v534
    %v536 = vpop.f32.mrb[0].mxu0
    %537 = vdwg.mxu0
    %v538 = vpack.c.bf16 %v535, %v532
    %v539 = vld [vmem:[#allocation11] sm:$0xff]
    %v540 = vld [vmem:[#allocation11 + $0x8] sm:$0xff]
    %v541 = vld [vmem:[#allocation11 + $0x10] sm:$0xff]
    %v542 = vld [vmem:[#allocation11 + $0x18] sm:$0xff]
    %v543 = vld [vmem:[#allocation11 + $0x20] sm:$0xff]
    %v544 = vld [vmem:[#allocation11 + $0x28] sm:$0xff]
    %v545 = vld [vmem:[#allocation11 + $0x30] sm:$0xff]
    %v546 = vld [vmem:[#allocation11 + $0x38] sm:$0xff]
    %v547 = vld [vmem:[#allocation11 + $0x40] sm:$0xff]
    %v548 = vld [vmem:[#allocation11 + $0x48] sm:$0xff]
    %v549 = vld [vmem:[#allocation11 + $0x50] sm:$0xff]
    %v550 = vld [vmem:[#allocation11 + $0x58] sm:$0xff]
    %v551 = vld [vmem:[#allocation11 + $0x60] sm:$0xff]
    %v552 = vld [vmem:[#allocation11 + $0x68] sm:$0xff]
    %v553 = vld [vmem:[#allocation11 + $0x70] sm:$0xff]
    %v554 = vld [vmem:[#allocation11 + $0x78] sm:$0xff]
    %v555 = vld [vmem:[%s9] sm:$0x3]
    %v557 = vlaneseq
    %v558 = vshrl.u32 %v557, 7
    %v559 = vsub.s32 0, %v558
    %v560 = vrot.slane %v555, %v559
    %v561 = vlaneseq
    %v562 = vshrl.u32 %v561, 7
    %v563 = vsub.s32 1, %v562
    %v564 = vrot.slane %v555, %v563
    %v583 = vunpack.c.l.b16 %v539
    %v584 = vunpack.c.h.b16 %v539
    %v585 = vunpack.c.l.b16 %v540
    %v586 = vunpack.c.h.b16 %v540
    %v587 = vunpack.c.l.b16 %v541
    %v588 = vunpack.c.h.b16 %v541
    %v589 = vunpack.c.l.b16 %v542
    %v590 = vunpack.c.h.b16 %v542
    %v591 = vunpack.c.l.b16 %v543
    %v592 = vunpack.c.h.b16 %v543
    %v593 = vunpack.c.l.b16 %v544
    %v594 = vunpack.c.h.b16 %v544
    %v595 = vunpack.c.l.b16 %v545
    %v596 = vunpack.c.h.b16 %v545
    %v597 = vunpack.c.l.b16 %v546
    %v598 = vunpack.c.h.b16 %v546
    %v599 = vunpack.c.l.b16 %v547
    %v600 = vunpack.c.h.b16 %v547
    %v601 = vunpack.c.l.b16 %v548
    %v602 = vunpack.c.h.b16 %v548
    %v603 = vunpack.c.l.b16 %v549
    %v604 = vunpack.c.h.b16 %v549
    %v605 = vunpack.c.l.b16 %v550
    %v606 = vunpack.c.h.b16 %v550
    %v607 = vunpack.c.l.b16 %v551
    %v608 = vunpack.c.h.b16 %v551
    %v609 = vunpack.c.l.b16 %v552
    %v610 = vunpack.c.h.b16 %v552
    %v611 = vunpack.c.l.b16 %v553
    %v612 = vunpack.c.h.b16 %v553
    %v613 = vunpack.c.l.b16 %v554
    %v614 = vunpack.c.h.b16 %v554
    %v615 = vpack.c.b16 %v585, %v583
    %v616 = vpack.c.b16 %v586, %v584
    %v617 = vpack.c.b16 %v589, %v587
    %v618 = vpack.c.b16 %v590, %v588
    %v619 = vpack.c.b16 %v593, %v591
    %v620 = vpack.c.b16 %v594, %v592
    %v621 = vpack.c.b16 %v597, %v595
    %v622 = vpack.c.b16 %v598, %v596
    %v623 = vpack.c.b16 %v601, %v599
    %v624 = vpack.c.b16 %v602, %v600
    %v625 = vpack.c.b16 %v605, %v603
    %v626 = vpack.c.b16 %v606, %v604
    %v627 = vpack.c.b16 %v609, %v607
    %v628 = vpack.c.b16 %v610, %v608
    %v629 = vpack.c.b16 %v613, %v611
    %v630 = vpack.c.b16 %v614, %v612
    %647 = vmatprep.subr.bf16.mxu0 %v616
    %648 = vmatpush1.bf16.msra.mxu0 %v615
    %649 = vmatprep.subr.bf16.mxu0 %v618
    %650 = vmatpush1.bf16.msra.mxu0 %v617
    %651 = vmatprep.subr.bf16.mxu0 %v620
    %652 = vmatpush1.bf16.msra.mxu0 %v619
    %653 = vmatprep.subr.bf16.mxu0 %v622
    %654 = vmatpush1.bf16.msra.mxu0 %v621
    %655 = vmatprep.subr.bf16.mxu0 %v624
    %656 = vmatpush1.bf16.msra.mxu0 %v623
    %657 = vmatprep.subr.bf16.mxu0 %v626
    %658 = vmatpush1.bf16.msra.mxu0 %v625
    %659 = vmatprep.subr.bf16.mxu0 %v628
    %660 = vmatpush1.bf16.msra.mxu0 %v627
    %661 = vmatprep.subr.bf16.mxu0 %v630
    %662 = vmatpush1.bf16.msra.mxu0 %v629
    %663 = vmatprep.subr.bf16.mxu0 0
    %664 = vmatpush1.bf16.msra.mxu0 0
    %665 = vmatprep.subr.bf16.mxu0 0
    %666 = vmatpush1.bf16.msra.mxu0 0
    %667 = vmatprep.subr.bf16.mxu0 0
    %668 = vmatpush1.bf16.msra.mxu0 0
    %669 = vmatprep.subr.bf16.mxu0 0
    %670 = vmatpush1.bf16.msra.mxu0 0
    %671 = vmatprep.subr.bf16.mxu0 0
    %672 = vmatpush1.bf16.msra.mxu0 0
    %673 = vmatprep.subr.bf16.mxu0 0
    %674 = vmatpush1.bf16.msra.mxu0 0
    %675 = vmatprep.subr.bf16.mxu0 0
    %676 = vmatpush1.bf16.msra.mxu0 0
    %677 = vmatprep.subr.bf16.mxu0 0
    %678 = vmatpush1.bf16.msra.mxu0 0
    %679 = vmatprep.mubr.bf16.mxu0 0
    %680 = vmatmul.mubr.bf16.gmra.mrb[0].mxu0 %v538
    %v681 = vpop.f32.mrb[0].mxu0
    %v682 = vadd.f32 %v560, %v681
    %v683 = vpop.f32.mrb[0].mxu0
    %v684 = vadd.f32 %v564, %v683
    %v685 = vpop.f32.mrb[0].mxu0
    %v686 = vadd.f32 %v560, %v685
    %v687 = vpop.f32.mrb[0].mxu0
    %v688 = vadd.f32 %v564, %v687
    %689 = vdwg.mxu0
    %v690 = vld [vmem:[#allocation5] sm:$0xff]
    %v691 = vld [vmem:[#allocation5 + $0x8] sm:$0xff]
    %v692 = vmul.f32 %v684, 0.5
    %v693 = vmul.f32 %v688, 0.5
    %v694 = vmul.f32 %v692, 1.442695
    %v695 = vpow.pop %v694
    %v696 = vmul.f32 %v693, 1.442695
    %v697 = vpow.pop %v696
    %v698 = vmul.f32 %v690, %v695
    %v699 = vmul.f32 %v691, %v697
    %v700 = vadd.f32 %v682, %v698
    %v701 = vadd.f32 %v686, %v699
    %v702 = vpack.c.bf16 %v701, %v700
    %v703 = vld [vmem:[#allocation13] sm:$0xf]
    %v704 = vld [vmem:[#allocation13 + $0x4] sm:$0xf]
    %v705 = vld [vmem:[#allocation13 + $0x8] sm:$0xf]
    %v706 = vld [vmem:[#allocation13 + $0xc] sm:$0xf]
    %v707 = vld [vmem:[#allocation13 + $0x10] sm:$0xf]
    %v708 = vld [vmem:[#allocation13 + $0x14] sm:$0xf]
    %v709 = vld [vmem:[#allocation13 + $0x18] sm:$0xf]
    %v710 = vld [vmem:[#allocation13 + $0x1c] sm:$0xf]
    %v711 = vld [vmem:[#allocation13 + $0x20] sm:$0xf]
    %v712 = vld [vmem:[#allocation13 + $0x24] sm:$0xf]
    %v713 = vld [vmem:[#allocation13 + $0x28] sm:$0xf]
    %v714 = vld [vmem:[#allocation13 + $0x2c] sm:$0xf]
    %v715 = vld [vmem:[#allocation13 + $0x30] sm:$0xf]
    %v716 = vld [vmem:[#allocation13 + $0x34] sm:$0xf]
    %v717 = vld [vmem:[#allocation13 + $0x38] sm:$0xf]
    %v718 = vld [vmem:[#allocation13 + $0x3c] sm:$0xf]
    %v719 = vld [vmem:[%s11] sm:$0x1]
    %v721 = vlaneseq
    %v722 = vshrl.u32 %v721, 7
    %v723 = vsub.s32 0, %v722
    %v724 = vrot.slane %v719, %v723
    %v742 = vunpack.c.l.b16 %v703
    %v743 = vunpack.c.l.b16 %v704
    %v744 = vunpack.c.l.b16 %v705
    %v745 = vunpack.c.l.b16 %v706
    %v746 = vunpack.c.l.b16 %v707
    %v747 = vunpack.c.l.b16 %v708
    %v748 = vunpack.c.l.b16 %v709
    %v749 = vunpack.c.l.b16 %v710
    %v750 = vunpack.c.l.b16 %v711
    %v751 = vunpack.c.l.b16 %v712
    %v752 = vunpack.c.l.b16 %v713
    %v753 = vunpack.c.l.b16 %v714
    %v754 = vunpack.c.l.b16 %v715
    %v755 = vunpack.c.l.b16 %v716
    %v756 = vunpack.c.l.b16 %v717
    %v757 = vunpack.c.l.b16 %v718
    %v758 = vpack.c.b16 %v743, %v742
    %v759 = vpack.c.b16 %v745, %v744
    %v760 = vpack.c.b16 %v747, %v746
    %v761 = vpack.c.b16 %v749, %v748
    %v762 = vpack.c.b16 %v751, %v750
    %v763 = vpack.c.b16 %v753, %v752
    %v764 = vpack.c.b16 %v755, %v754
    %v765 = vpack.c.b16 %v757, %v756
    %774 = vmatprep.subr.bf16.mxu0 0
    %775 = vmatpush1.bf16.msra.mxu0 %v758
    %776 = vmatprep.subr.bf16.mxu0 0
    %777 = vmatpush1.bf16.msra.mxu0 %v759
    %778 = vmatprep.subr.bf16.mxu0 0
    %779 = vmatpush1.bf16.msra.mxu0 %v760
    %780 = vmatprep.subr.bf16.mxu0 0
    %781 = vmatpush1.bf16.msra.mxu0 %v761
    %782 = vmatprep.subr.bf16.mxu0 0
    %783 = vmatpush1.bf16.msra.mxu0 %v762
    %784 = vmatprep.subr.bf16.mxu0 0
    %785 = vmatpush1.bf16.msra.mxu0 %v763
    %786 = vmatprep.subr.bf16.mxu0 0
    %787 = vmatpush1.bf16.msra.mxu0 %v764
    %788 = vmatprep.subr.bf16.mxu0 0
    %789 = vmatpush1.bf16.msra.mxu0 %v765
    %790 = vmatprep.subr.bf16.mxu0 0
    %791 = vmatpush1.bf16.msra.mxu0 0
    %792 = vmatprep.subr.bf16.mxu0 0
    %793 = vmatpush1.bf16.msra.mxu0 0
    %794 = vmatprep.subr.bf16.mxu0 0
    %795 = vmatpush1.bf16.msra.mxu0 0
    %796 = vmatprep.subr.bf16.mxu0 0
    %797 = vmatpush1.bf16.msra.mxu0 0
    %798 = vmatprep.subr.bf16.mxu0 0
    %799 = vmatpush1.bf16.msra.mxu0 0
    %800 = vmatprep.subr.bf16.mxu0 0
    %801 = vmatpush1.bf16.msra.mxu0 0
    %802 = vmatprep.subr.bf16.mxu0 0
    %803 = vmatpush1.bf16.msra.mxu0 0
    %804 = vmatprep.subr.bf16.mxu0 0
    %805 = vmatpush1.bf16.msra.mxu0 0
    %806 = vmatprep.mubr.bf16.mxu0 0
    %807 = vmatmul.mubr.bf16.gmra.mrb[0].mxu0 %v702
    %v808 = vpop.f32.mrb[0].mxu0
    %v809 = vadd.f32 %v724, %v808
    %v810 = vpop.f32.mrb[0].mxu0
    %v811 = vpop.f32.mrb[0].mxu0
    %v812 = vadd.f32 %v724, %v811
    %v813 = vpop.f32.mrb[0].mxu0
    %814 = vdwg.mxu0
    %vm815 = vcmp.gt.f32.partialorder %v809, 0.0
    %vm816 = vcmp.gt.f32.partialorder %v812, 0.0
    %v817 = vmul.f32 %v809, 0.01
    %v818 = vmul.f32 %v812, 0.01
    %v819 = vsel %vm815, %v809, %v817
    %v820 = vsel %vm816, %v812, %v818
    %v821 = vpack.c.bf16 %v820, %v819
    %v822 = vld [vmem:[#allocation14] sm:$0xf]
    %v823 = vld [vmem:[#allocation14 + $0x4] sm:$0xf]
    %v824 = vld [vmem:[#allocation14 + $0x8] sm:$0xf]
    %v825 = vld [vmem:[#allocation14 + $0xc] sm:$0xf]
    %v826 = vld [vmem:[#allocation14 + $0x10] sm:$0xf]
    %v827 = vld [vmem:[#allocation14 + $0x14] sm:$0xf]
    %v828 = vld [vmem:[#allocation14 + $0x18] sm:$0xf]
    %v829 = vld [vmem:[#allocation14 + $0x1c] sm:$0xf]
    %v830 = vld [vmem:[#allocation14 + $0x20] sm:$0xf]
    %v831 = vld [vmem:[#allocation14 + $0x24] sm:$0xf]
    %v832 = vld [vmem:[#allocation14 + $0x28] sm:$0xf]
    %v833 = vld [vmem:[#allocation14 + $0x2c] sm:$0xf]
    %v834 = vld [vmem:[#allocation14 + $0x30] sm:$0xf]
    %v835 = vld [vmem:[#allocation14 + $0x34] sm:$0xf]
    %v836 = vld [vmem:[#allocation14 + $0x38] sm:$0xf]
    %v837 = vld [vmem:[#allocation14 + $0x3c] sm:$0xf]
    %v838 = vld [vmem:[%s13] sm:$0x1]
    %v840 = vlaneseq
    %v841 = vshrl.u32 %v840, 7
    %v842 = vsub.s32 0, %v841
    %v843 = vrot.slane %v838, %v842
    %v861 = vunpack.c.l.b16 %v822
    %v862 = vunpack.c.l.b16 %v823
    %v863 = vunpack.c.l.b16 %v824
    %v864 = vunpack.c.l.b16 %v825
    %v865 = vunpack.c.l.b16 %v826
    %v866 = vunpack.c.l.b16 %v827
    %v867 = vunpack.c.l.b16 %v828
    %v868 = vunpack.c.l.b16 %v829
    %v869 = vunpack.c.l.b16 %v830
    %v870 = vunpack.c.l.b16 %v831
    %v871 = vunpack.c.l.b16 %v832
    %v872 = vunpack.c.l.b16 %v833
    %v873 = vunpack.c.l.b16 %v834
    %v874 = vunpack.c.l.b16 %v835
    %v875 = vunpack.c.l.b16 %v836
    %v876 = vunpack.c.l.b16 %v837
    %v877 = vpack.c.b16 %v862, %v861
    %v878 = vpack.c.b16 %v864, %v863
    %v879 = vpack.c.b16 %v866, %v865
    %v880 = vpack.c.b16 %v868, %v867
    %v881 = vpack.c.b16 %v870, %v869
    %v882 = vpack.c.b16 %v872, %v871
    %v883 = vpack.c.b16 %v874, %v873
    %v884 = vpack.c.b16 %v876, %v875
    %893 = vmatprep.subr.bf16.mxu0 0
    %894 = vmatpush1.bf16.msra.mxu0 %v877
    %895 = vmatprep.subr.bf16.mxu0 0
    %896 = vmatpush1.bf16.msra.mxu0 %v878
    %897 = vmatprep.subr.bf16.mxu0 0
    %898 = vmatpush1.bf16.msra.mxu0 %v879
    %899 = vmatprep.subr.bf16.mxu0 0
    %900 = vmatpush1.bf16.msra.mxu0 %v880
    %901 = vmatprep.subr.bf16.mxu0 0
    %902 = vmatpush1.bf16.msra.mxu0 %v881
    %903 = vmatprep.subr.bf16.mxu0 0
    %904 = vmatpush1.bf16.msra.mxu0 %v882
    %905 = vmatprep.subr.bf16.mxu0 0
    %906 = vmatpush1.bf16.msra.mxu0 %v883
    %907 = vmatprep.subr.bf16.mxu0 0
    %908 = vmatpush1.bf16.msra.mxu0 %v884
    %909 = vmatprep.subr.bf16.mxu0 0
    %910 = vmatpush1.bf16.msra.mxu0 0
    %911 = vmatprep.subr.bf16.mxu0 0
    %912 = vmatpush1.bf16.msra.mxu0 0
    %913 = vmatprep.subr.bf16.mxu0 0
    %914 = vmatpush1.bf16.msra.mxu0 0
    %915 = vmatprep.subr.bf16.mxu0 0
    %916 = vmatpush1.bf16.msra.mxu0 0
    %917 = vmatprep.subr.bf16.mxu0 0
    %918 = vmatpush1.bf16.msra.mxu0 0
    %919 = vmatprep.subr.bf16.mxu0 0
    %920 = vmatpush1.bf16.msra.mxu0 0
    %921 = vmatprep.subr.bf16.mxu0 0
    %922 = vmatpush1.bf16.msra.mxu0 0
    %923 = vmatprep.subr.bf16.mxu0 0
    %924 = vmatpush1.bf16.msra.mxu0 0
    %925 = vmatprep.mubr.bf16.mxu0 0
    %926 = vmatmul.mubr.bf16.gmra.mrb[0].mxu0 %v821
    %v927 = vpop.f32.mrb[0].mxu0
    %v928 = vadd.f32 %v843, %v927
    %v929 = vpop.f32.mrb[0].mxu0
    %v930 = vpop.f32.mrb[0].mxu0
    %v931 = vadd.f32 %v843, %v930
    %v932 = vpop.f32.mrb[0].mxu0
    %933 = vdwg.mxu0
    %vm934 = vcmp.gt.f32.partialorder %v928, 0.0
    %vm935 = vcmp.gt.f32.partialorder %v931, 0.0
    %v936 = vmul.f32 %v928, 0.01
    %v937 = vmul.f32 %v931, 0.01
    %v938 = vsel %vm934, %v928, %v936
    %v939 = vsel %vm935, %v931, %v937
    %v940 = vpack.c.bf16 %v939, %v938
    %v941 = vld [vmem:[#allocation16] sm:$0xf]
    %v942 = vld [vmem:[#allocation16 + $0x4] sm:$0xf]
    %v943 = vld [vmem:[#allocation16 + $0x8] sm:$0xf]
    %v944 = vld [vmem:[#allocation16 + $0xc] sm:$0xf]
    %v945 = vld [vmem:[#allocation16 + $0x10] sm:$0xf]
    %v946 = vld [vmem:[#allocation16 + $0x14] sm:$0xf]
    %v947 = vld [vmem:[#allocation16 + $0x18] sm:$0xf]
    %v948 = vld [vmem:[#allocation16 + $0x1c] sm:$0xf]
    %v949 = vld [vmem:[#allocation16 + $0x20] sm:$0xf]
    %v950 = vld [vmem:[#allocation16 + $0x24] sm:$0xf]
    %v951 = vld [vmem:[#allocation16 + $0x28] sm:$0xf]
    %v952 = vld [vmem:[#allocation16 + $0x2c] sm:$0xf]
    %v953 = vld [vmem:[#allocation16 + $0x30] sm:$0xf]
    %v954 = vld [vmem:[#allocation16 + $0x34] sm:$0xf]
    %v955 = vld [vmem:[#allocation16 + $0x38] sm:$0xf]
    %v956 = vld [vmem:[#allocation16 + $0x3c] sm:$0xf]
    %v957 = vld [vmem:[%s15] sm:$0x1]
    %v959 = vlaneseq
    %v960 = vshrl.u32 %v959, 7
    %v961 = vsub.s32 0, %v960
    %v962 = vrot.slane %v957, %v961
    %v980 = vunpack.c.l.b16 %v941
    %v981 = vunpack.c.l.b16 %v942
    %v982 = vunpack.c.l.b16 %v943
    %v983 = vunpack.c.l.b16 %v944
    %v984 = vunpack.c.l.b16 %v945
    %v985 = vunpack.c.l.b16 %v946
    %v986 = vunpack.c.l.b16 %v947
    %v987 = vunpack.c.l.b16 %v948
    %v988 = vunpack.c.l.b16 %v949
    %v989 = vunpack.c.l.b16 %v950
    %v990 = vunpack.c.l.b16 %v951
    %v991 = vunpack.c.l.b16 %v952
    %v992 = vunpack.c.l.b16 %v953
    %v993 = vunpack.c.l.b16 %v954
    %v994 = vunpack.c.l.b16 %v955
    %v995 = vunpack.c.l.b16 %v956
    %v996 = vpack.c.b16 %v981, %v980
    %v997 = vpack.c.b16 %v983, %v982
    %v998 = vpack.c.b16 %v985, %v984
    %v999 = vpack.c.b16 %v987, %v986
    %v1000 = vpack.c.b16 %v989, %v988
    %v1001 = vpack.c.b16 %v991, %v990
    %v1002 = vpack.c.b16 %v993, %v992
    %v1003 = vpack.c.b16 %v995, %v994
    %1012 = vmatprep.subr.bf16.mxu0 0
    %1013 = vmatpush1.bf16.msra.mxu0 %v996
    %1014 = vmatprep.subr.bf16.mxu0 0
    %1015 = vmatpush1.bf16.msra.mxu0 %v997
    %1016 = vmatprep.subr.bf16.mxu0 0
    %1017 = vmatpush1.bf16.msra.mxu0 %v998
    %1018 = vmatprep.subr.bf16.mxu0 0
    %1019 = vmatpush1.bf16.msra.mxu0 %v999
    %1020 = vmatprep.subr.bf16.mxu0 0
    %1021 = vmatpush1.bf16.msra.mxu0 %v1000
    %1022 = vmatprep.subr.bf16.mxu0 0
    %1023 = vmatpush1.bf16.msra.mxu0 %v1001
    %1024 = vmatprep.subr.bf16.mxu0 0
    %1025 = vmatpush1.bf16.msra.mxu0 %v1002
    %1026 = vmatprep.subr.bf16.mxu0 0
    %1027 = vmatpush1.bf16.msra.mxu0 %v1003
    %1028 = vmatprep.subr.bf16.mxu0 0
    %1029 = vmatpush1.bf16.msra.mxu0 0
    %1030 = vmatprep.subr.bf16.mxu0 0
    %1031 = vmatpush1.bf16.msra.mxu0 0
    %1032 = vmatprep.subr.bf16.mxu0 0
    %1033 = vmatpush1.bf16.msra.mxu0 0
    %1034 = vmatprep.subr.bf16.mxu0 0
    %1035 = vmatpush1.bf16.msra.mxu0 0
    %1036 = vmatprep.subr.bf16.mxu0 0
    %1037 = vmatpush1.bf16.msra.mxu0 0
    %1038 = vmatprep.subr.bf16.mxu0 0
    %1039 = vmatpush1.bf16.msra.mxu0 0
    %1040 = vmatprep.subr.bf16.mxu0 0
    %1041 = vmatpush1.bf16.msra.mxu0 0
    %1042 = vmatprep.subr.bf16.mxu0 0
    %1043 = vmatpush1.bf16.msra.mxu0 0
    %1044 = vmatprep.mubr.bf16.mxu0 0
    %1045 = vmatmul.mubr.bf16.gmra.mrb[0].mxu0 %v940
    %v1046 = vpop.f32.mrb[0].mxu0
    %v1047 = vadd.f32 %v962, %v1046
    %v1048 = vpop.f32.mrb[0].mxu0
    %v1049 = vpop.f32.mrb[0].mxu0
    %v1050 = vadd.f32 %v962, %v1049
    %v1051 = vpop.f32.mrb[0].mxu0
    %1052 = vdwg.mxu0
    %1053 = vst [vmem:[#allocation17] sm:$0xff] %v1047
    %1054 = vst [vmem:[#allocation17 + $0x8] sm:$0xff] %v1050
    %1055 = vst [vmem:[#allocation18] sm:$0xff] %v682
    %1056 = vst [vmem:[#allocation18 + $0x8] sm:$0xff] %v684
    %1057 = vst [vmem:[#allocation18 + $0x10] sm:$0xff] %v686
    %1058 = vst [vmem:[#allocation18 + $0x18] sm:$0xff] %v688
    // Predicated region
    $region102: #{tpu_custom_call.1} parent=1 // pred_check
      _
    $region103: #{tpu_custom_call.1} parent=1 // pred_check_branch
      %1060 = sbr.rel (0) target = $region105
    $region104: #{tpu_custom_call.1} parent=1 // pred_region
      %s1062 = ssub.s32 256, 256
      %1063 = vsyncadd [#allocation4], %s1062
      %s1064 = sshll.u32 [#allocation17], 4
      %s1065 = int_to_ptr.vmem [resolvable:$true] %s1064
      %1070 = dma.vmem_to_hbm [thread:$0]  %s1065, 256, %s16, [#allocation4], 128, 128, 8
    $region105: #{tpu_custom_call.1} parent=1 // pred_fallthru
      _
    // Predicated region
    $region106: #{tpu_custom_call.1} parent=1 // pred_check
      _
    $region107: #{tpu_custom_call.1} parent=1 // pred_check_branch
      %1072 = sbr.rel (0) target = $region109
    $region108: #{tpu_custom_call.1} parent=1 // pred_region
      %s1074 = ssub.s32 512, 512
      %1075 = vsyncadd [#allocation19], %s1074
      %s1076 = sshll.u32 [#allocation18], 4
      %s1077 = int_to_ptr.vmem [resolvable:$true] %s1076
      %1082 = dma.vmem_to_hbm [thread:$0]  %s1077, 512, %s17, [#allocation19], 256, 256, 16
    $region109: #{tpu_custom_call.1} parent=1 // pred_fallthru
      _
    // Predicated region
    $region110: #{tpu_custom_call.1} parent=1 // pred_check
      _
    $region111: #{tpu_custom_call.1} parent=1 // pred_check_branch
      %1084 = sbr.rel (0) target = $region113
    $region112: #{tpu_custom_call.1} parent=1 // pred_region
      %1085 = dma.done [#allocation4], 256
    $region113: #{tpu_custom_call.1} parent=1 // pred_fallthru
      _
    // Predicated region
    $region114: #{tpu_custom_call.1} parent=1 // pred_check
      _
    $region115: #{tpu_custom_call.1} parent=1 // pred_check_branch
      %1087 = sbr.rel (0) target = $region117
    $region116: #{tpu_custom_call.1} parent=1 // pred_region
      %1088 = dma.done [#allocation19], 512
    $region117: #{tpu_custom_call.1} parent=1 // pred_fallthru
      _
    %1089 = vsyncpa [#allocation3], 1
    %1090 = vsyncpa [#allocation6], 1
    %1091 = vsyncpa [#allocation9], 1
    %1092 = vsyncpa [#allocation12], 1
    %1093 = vsyncpa [#allocation15], 1
    %1094 = vsyncpa [#allocation4], 1
    %1095 = vsyncpa [#allocation19], 1

</llo_original>
